<compile_context>
chip_gen: v6e
topology: v6e:2x2x1
jax: 0.10.0
libtpu: 0.0.40
codegen_flags: <defaults>
</compile_context>

<pallas_src>
import math

import jax
import jax.numpy as jnp
from jax.experimental import pallas as pl
from jax.experimental.pallas import tpu as pltpu


# ---------------------------------------------------------------------------
# Kernels
# ---------------------------------------------------------------------------
def _gated_kernel(a_ref, b_ref, o_ref):
    """(1, tc, H, W) slabs: out[c] = tanh(a[c]) @ sigmoid(b[c]) for every channel."""
    a = jnp.tanh(a_ref[0].astype(jnp.float32))          # EUP, f32 (v5e-safe)
    s = jax.nn.sigmoid(b_ref[0].astype(jnp.float32))
    if a_ref.dtype == jnp.bfloat16:
        # Feed the MXU its native bf16 operands; keep the f32 accumulator.
        a = a.astype(jnp.bfloat16)
        s = s.astype(jnp.bfloat16)
    out = jnp.einsum("bij,bjk->bik", a, s,              # batched MXU matmul
                     preferred_element_type=jnp.float32)
    o_ref[0] = out.astype(o_ref.dtype)


def _relu_kernel(x_ref, o_ref):
    o_ref[...] = jnp.maximum(x_ref[...], 0).astype(o_ref.dtype)


# ---------------------------------------------------------------------------
# Tile-size helpers (byte-based, padded-layout aware)
# ---------------------------------------------------------------------------
def _pick_tc(N, C, H, W, itemsize, budget_bytes):
    """Channels per gated block: divisor of C, fits a padded-VMEM budget, and keeps
    the grid at >= min(4, N*C) steps so TCs/pipelining have work to split."""
    pad_h = -(-H // 8) * 8
    pad_w = -(-W // 128) * 128
    per_ch_io = pad_h * pad_w * itemsize     # one (H, W) map in VMEM, padded, x.dtype
    per_ch_f32 = pad_h * pad_w * 4           # f32 temporaries inside the kernel
    # a, b, out refs are double-buffered by the pipeline; ~3 f32 temporaries live.
    per_channel = 3 * 2 * per_ch_io + 3 * per_ch_f32
    max_tc = max(1, budget_bytes // per_channel)

    target_steps = min(4, N * C)
    best = 1
    for d in range(1, C + 1):
        if C % d != 0 or d > max_tc:
            continue
        if N * (C // d) >= target_steps:
            best = d
    return best


def _relu_layout(total):
    """Pick a lane width (multiple of 128) for a flat view; prefer >= 8 rows."""
    for lanes in (4096, 2048, 1024, 512, 256, 128):
        if total % lanes == 0 and total // lanes >= 8:
            return lanes, 0
    for lanes in (4096, 2048, 1024, 512, 256, 128):
        if total % lanes == 0:
            return lanes, 0
    pad = (-total) % 128
    return 128, pad


# ---------------------------------------------------------------------------
# Wrappers
# ---------------------------------------------------------------------------
def gated_activation(x, *, vmem_budget_bytes=8 << 20, vmem_limit_bytes=32 << 20):
    """PyTorch gated_activation: chunk along dim 1, tanh/sigmoid, torch.matmul.

    x: (N, 2*C, H, W) with H == W.  Returns (N, C, H, W) in x.dtype.
    No host-side slicing: x is passed twice and the b-operand index_map offsets
    by C channel-blocks.
    """
    N, C2, H, W = x.shape
    assert C2 % 2 == 0, "channel dim must be even for chunk(2, dim=1)"
    # torch.matmul over the two spatial dims only works for square maps.
    assert H == W, "gated_activation (torch.matmul over spatial dims) needs H == W"
    C = C2 // 2
    itemsize = x.dtype.itemsize

    tc = _pick_tc(N, C, H, W, itemsize, vmem_budget_bytes)
    n_cblk = C // tc

    out = pl.pallas_call(
        _gated_kernel,
        out_shape=jax.ShapeDtypeStruct((N, C, H, W), x.dtype),
        grid_spec=pltpu.PrefetchScalarGridSpec(
            num_scalar_prefetch=0,
            grid=(N, n_cblk),
            in_specs=[
                # a-half: channel blocks [0, n_cblk)
                pl.BlockSpec((1, tc, H, W), lambda n, c: (n, c, 0, 0)),
                # b-half: same buffer, channel blocks offset by n_cblk
                pl.BlockSpec((1, tc, H, W), lambda n, c: (n, c + n_cblk, 0, 0)),
            ],
            out_specs=pl.BlockSpec((1, tc, H, W), lambda n, c: (n, c, 0, 0)),
        ),
        compiler_params=pltpu.CompilerParams(
            dimension_semantics=("parallel", "parallel"),  # v7x: shard across 2 TCs
            vmem_limit_bytes=vmem_limit_bytes,
        ),
    )(x, x)
    return out


def relu(x, *, block_bytes=2 << 20, vmem_limit_bytes=32 << 20):
    """Elementwise ReLU on a lane/sublane-dense (rows, 128*k) view, byte-sized tiles."""
    orig_shape = x.shape
    total = math.prod(orig_shape) if orig_shape else 1
    if total == 0:
        return x

    lanes, pad = _relu_layout(total)
    flat = x.reshape(total)
    if pad:
        # TODO(synk): padding copy only for sizes not a multiple of 128 elements.
        flat = jnp.pad(flat, (0, pad))
    rows = (total + pad) // lanes
    x2 = flat.reshape(rows, lanes)

    itemsize = x.dtype.itemsize
    if rows <= 8:
        tr = rows                                   # block == full array dims (legal)
    else:
        tr = (block_bytes // (lanes * itemsize)) // 8 * 8
        tr = max(8, tr)
        if tr >= rows:
            tr = rows
        # else: tr % 8 == 0, ragged last block is handled by Pallas masking.

    out2 = pl.pallas_call(
        _relu_kernel,
        out_shape=jax.ShapeDtypeStruct((rows, lanes), x.dtype),
        grid_spec=pltpu.PrefetchScalarGridSpec(
            num_scalar_prefetch=0,
            grid=(pl.cdiv(rows, tr),),
            in_specs=[pl.BlockSpec((tr, lanes), lambda i: (i, 0))],
            out_specs=pl.BlockSpec((tr, lanes), lambda i: (i, 0)),
        ),
        compiler_params=pltpu.CompilerParams(
            dimension_semantics=("parallel",),
            vmem_limit_bytes=vmem_limit_bytes,
        ),
    )(x2)

    out = out2.reshape(total + pad)
    if pad:
        out = out[:total]
    return out.reshape(orig_shape)


class Activation:
    """Pallas equivalent of models.Activation (forward only)."""

    def __init__(self, activation_func, *args, **kwargs):
        if activation_func == "gated":
            self.activation = gated_activation
        elif activation_func == "relu":
            self.activation = relu
        else:
            raise ValueError(f"unknown activation_func: {activation_func!r}")

    def __call__(self, x):
        return self.activation(x)


# ---------------------------------------------------------------------------
if __name__ == "__main__":
    key = jax.random.PRNGKey(0)
    x = jax.random.normal(key, (2, 4, 16, 16), dtype=jnp.float32)  # NCHW

    gated = Activation("gated")
    relu_act = Activation("relu")

    out_g = jax.jit(gated)(x)
    out_r = jax.jit(relu_act)(x)

    # Exercise the padded / non-128-aligned relu path as well.
    x_odd = jax.random.normal(jax.random.PRNGKey(0), (3, 5, 7), dtype=jnp.float32)
    out_r_odd = jax.jit(relu_act)(x_odd)

    jax.block_until_ready((out_g, out_r, out_r_odd))

    # Pure-JAX reference (matches the PyTorch semantics).
    ga, gb = jnp.split(x, 2, axis=1)
    ref_g = jnp.matmul(jnp.tanh(ga), jax.nn.sigmoid(gb))
    ref_r = jnp.maximum(x, 0.0)
    ref_r_odd = jnp.maximum(x_odd, 0.0)

    assert out_g.shape == (2, 2, 16, 16), out_g.shape
    assert out_r.shape == x.shape, out_r.shape
    assert out_r_odd.shape == x_odd.shape, out_r_odd.shape
    assert jnp.allclose(out_g, ref_g, atol=1e-5, rtol=1e-5)
    assert jnp.allclose(out_r, ref_r)
    assert jnp.allclose(out_r_odd, ref_r_odd)
    print("KERNEL_OK")
</pallas_src>

<mosaic_0001>
module attributes {stable_mosaic.version = 11 : i64} {
  func.func @_gated_kernel(%arg0: i32, %arg1: i32, %arg2: memref<1x1x16x16xf32, #tpu.memory_space<vmem>>, %arg3: memref<1x1x16x16xf32, #tpu.memory_space<vmem>>, %arg4: memref<1x1x16x16xf32, #tpu.memory_space<vmem>>) attributes {dimension_semantics = [#tpu.dimension_semantics<parallel>, #tpu.dimension_semantics<parallel>], iteration_bounds = array<i64: 2, 2>, scalar_prefetch = 0 : i64, scratch_operands = 0 : i64, tpu.core_type = #tpu.core_type<tc>, window_params = [{transform_indices = @transform_0, window_bounds = array<i64: 1, 1, 16, 16>}, {transform_indices = @transform_1, window_bounds = array<i64: 1, 1, 16, 16>}, {transform_indices = @transform_2, window_bounds = array<i64: 1, 1, 16, 16>}]} {
    %c0 = arith.constant 0 : index
    %c0_0 = arith.constant 0 : index
    %c0_1 = arith.constant 0 : index
    %c0_2 = arith.constant 0 : index
    %0 = vector.load %arg2[%c0, %c0_0, %c0_1, %c0_2] : memref<1x1x16x16xf32, #tpu.memory_space<vmem>>, vector<1x1x16x16xf32>
    %1 = vector.shape_cast %0 : vector<1x1x16x16xf32> to vector<1x16x16xf32>
    %2 = math.tanh %1 : vector<1x16x16xf32>
    %c0_3 = arith.constant 0 : index
    %c0_4 = arith.constant 0 : index
    %c0_5 = arith.constant 0 : index
    %c0_6 = arith.constant 0 : index
    %3 = vector.load %arg3[%c0_3, %c0_4, %c0_5, %c0_6] : memref<1x1x16x16xf32, #tpu.memory_space<vmem>>, vector<1x1x16x16xf32>
    %4 = vector.shape_cast %3 : vector<1x1x16x16xf32> to vector<1x16x16xf32>
    %5 = arith.negf %4 : vector<1x16x16xf32>
    %6 = math.exp %5 : vector<1x16x16xf32>
    %cst = arith.constant 1.000000e+00 : f32
    %7 = vector.broadcast %cst : f32 to vector<1x16x16xf32>
    %8 = arith.addf %7, %6 : vector<1x16x16xf32>
    %9 = arith.divf %7, %8 : vector<1x16x16xf32>
    "tpu.trace_start"() <{level = 10 : i32, message = "bij,bjk->bik"}> : () -> ()
    %cst_7 = arith.constant dense<0.000000e+00> : vector<1x16x16xf32>
    %10 = tpu.matmul %2, %9, %cst_7 {dimension_numbers = #tpu.dot_dimension_numbers<[2], [1], [1], [2], [0, 0, 0, 1, 1, 2], [0], [0]>} : vector<1x16x16xf32>, vector<1x16x16xf32>, vector<1x16x16xf32> -> vector<1x16x16xf32>
    "tpu.trace_stop"() : () -> ()
    %c0_8 = arith.constant 0 : index
    %c0_9 = arith.constant 0 : index
    %c0_10 = arith.constant 0 : index
    %c0_11 = arith.constant 0 : index
    %11 = vector.load %arg4[%c0_8, %c0_9, %c0_10, %c0_11] : memref<1x1x16x16xf32, #tpu.memory_space<vmem>>, vector<1x1x16x16xf32>
    %12 = vector.shape_cast %11 : vector<1x1x16x16xf32> to vector<1x16x16xf32>
    %13 = vector.shape_cast %10 : vector<1x16x16xf32> to vector<1x1x16x16xf32>
    tpu.vector_store %arg4[%c0_8, %c0_9, %c0_10, %c0_11], %13 {strides = array<i32>} : memref<1x1x16x16xf32, #tpu.memory_space<vmem>>, vector<1x1x16x16xf32>,
    return
  }
  func.func @transform_0(%arg0: i32, %arg1: i32) -> (i32, i32, i32, i32) {
    %c0_i32 = arith.constant 0 : i32
    %c0_i32_0 = arith.constant 0 : i32
    %c0_i32_1 = arith.constant 0 : i32
    return %arg0, %arg1, %c0_i32, %c0_i32_0 : i32, i32, i32, i32
  }
  func.func @transform_1(%arg0: i32, %arg1: i32) -> (i32, i32, i32, i32) {
    %c2_i32 = arith.constant 2 : i32
    %0 = arith.addi %arg1, %c2_i32 : i32
    %c0_i32 = arith.constant 0 : i32
    %c0_i32_0 = arith.constant 0 : i32
    %c0_i32_1 = arith.constant 0 : i32
    return %arg0, %0, %c0_i32, %c0_i32_0 : i32, i32, i32, i32
  }
  func.func @transform_2(%arg0: i32, %arg1: i32) -> (i32, i32, i32, i32) {
    %c0_i32 = arith.constant 0 : i32
    %c0_i32_0 = arith.constant 0 : i32
    %c0_i32_1 = arith.constant 0 : i32
    return %arg0, %arg1, %c0_i32, %c0_i32_0 : i32, i32, i32, i32
  }
}

</mosaic_0001>

<llo_original>
// kernel: _unnamed_function_.1
$region0: #{_unnamed_function_.1}
  #allocation0 [shape = 'u32[]', space=smem, size = 0x4, offset = 0x4, fixed_abs, tag = 'smem constant byte address 0x4 - core index']
  #allocation1 [shape = 'u32[144,128]{1,0:T(1,128)}', space=vmem, size = 0x12000, scoped, tag = 'internal scratch']
  %s0 = inlined_call_operand.hbm [shape: f32[2,4,16,16], index: 0, kind: input, shape index: {}, may-alias: {0,1}]
  %s1 = inlined_call_operand.hbm [shape: f32[2,4,16,16], index: 1, kind: input, shape index: {}, may-alias: {0,1}]
  %s2 = inlined_call_operand.hbm [shape: f32[2,2,16,16], index: 2, kind: output, shape index: {}]
  %s3 = sld [smem:[#allocation0]]
  $region49: #{_unnamed_function_.1} parent=0
    _
  %s5 = ssub.s32 1, %s3
  %s6 = scalar_select 0, %s5, %s3
  $region1: #{_unnamed_function_.1} parent=0
    #allocation2 [shape = 'u8[16384]{0}', space=vmem, size = 0x4000, scoped, tag = 'input window, operand 0']
    #allocation3 [shape = 's32[2]{0}', space=sflag, size = 0x8, scoped, tag = 'scoped memory for _unnamed_function_.1']
    #allocation4 [shape = 's32[2]{0}', space=sflag, size = 0x8, scoped, tag = 'scoped memory for _unnamed_function_.1']
    #allocation5 [shape = 'u8[16384]{0}', space=vmem, size = 0x4000, scoped, tag = 'input window, operand 1']
    #allocation6 [shape = 's32[2]{0}', space=sflag, size = 0x8, scoped, tag = 'scoped memory for _unnamed_function_.1']
    #allocation7 [shape = 'u8[16384]{0}', space=vmem, size = 0x4000, scoped, tag = 'output window, operand 0']
    %7 = vsyncpa [#allocation3], 0
    %s8 = scalar_lea.sflag [#allocation3], 1
    %9 = vsyncpa %s8, 0
    %10 = vsyncpa [#allocation6], 0
    %s11 = scalar_lea.sflag [#allocation6], 1
    %12 = vsyncpa %s11, 0
    %13 = vsyncpa [#allocation4], 0
    %s14 = scalar_lea.sflag [#allocation4], 1
    %15 = vsyncpa %s14, 0
    loop: start=0, step=1, limit=6
    $region2: #{_unnamed_function_.1} parent=1 // loop_pre_header
      _
    $region3: #{_unnamed_function_.1} parent=1 // loop_header
      %s17 = sphi 0, %s21
      %p18 = scmp.ge.s32.totalorder %s17, 6
      %s24 = sphi 0, %s36
      %s25 = sphi 0, %s32
      %s26 = sphi 0, %s24
      %s27 = sphi 0, %s25
      %s28 = sphi 0, %s26
      %s29 = sphi 0, %s27
      %s41 = sphi 0, %s43
      %s44 = sphi 0, %s41
      %s45 = sphi 0, %s44
      %s61 = sphi 0, %s45
      %s71 = sphi 0, %s73
      %s74 = sphi 0, %s71
      %s75 = sphi 0, %s74
      %s91 = sphi 0, %s75
      %s99 = sphi 0, %s101
      %s102 = sphi 0, %s99
      %s103 = sphi 0, %s102
      %s119 = sphi 0, %s103
    $region4: #{_unnamed_function_.1} parent=1 // loop_header_branch
      %20 = sbr.rel (%p18) target = $region8
    $region5: #{_unnamed_function_.1} parent=1 // loop_body
      %s22 = ssub.s32 %s17, 1
      %s23 = ssub.s32 %s17, 2
      %s30 = sadd.s32 1, %s25
      %p31 = scmp.ge.s32.totalorder %s30, 2
      %s32 = scalar_select %p31, 0, %s30
      %s33 = sadd.s32 1, %s24
      %s34 = scalar_select %p31, %s33, %s24
      %p35 = scmp.ge.s32.totalorder %s34, 2
      %s36 = scalar_select %p35, 0, %s34
      %s37 = ssub.s32 %s24, %s36
      %s38 = ssub.s32 %s25, %s32
      %s39 = sor.u32 %s37, %s38
      %p40 = scmp.eq.s32.totalorder %s39, 0
      %s42 = sadd.s32 %s41, 1
      %s43 = scalar_select %p40, %s41, %s42
      %p46 = pneg %p40
      %p47 = scmp.eq.s32.totalorder %s17, 3
      %p48 = por %p46, %p47
      %p49 = scmp.ne.s32.totalorder %s41, %s44
      %p50 = scmp.eq.s32.totalorder %s17, 0
      %p51 = por %p49, %p50
      %p52 = scmp.ne.s32.totalorder %s41, %s44
      %p53 = scmp.eq.s32.totalorder %s22, 3
      %p54 = por %p52, %p53
      %p55 = scmp.ne.s32.totalorder %s44, %s45
      %p56 = scmp.eq.s32.totalorder %s22, 0
      %p57 = por %p55, %p56
      %p58 = scmp.ne.s32.totalorder %s44, %s45
      %p59 = scmp.eq.s32.totalorder %s23, 3
      %p60 = por %p58, %p59
      %p62 = scmp.ne.s32.totalorder %s45, %s61
      %p63 = scmp.eq.s32.totalorder %s23, 0
      %p64 = por %p62, %p63
      %s65 = sadd.s32 %s25, 2
      %s66 = sadd.s32 %s32, 2
      %s67 = ssub.s32 %s24, %s36
      %s68 = ssub.s32 %s65, %s66
      %s69 = sor.u32 %s67, %s68
      %p70 = scmp.eq.s32.totalorder %s69, 0
      %s72 = sadd.s32 %s71, 1
      %s73 = scalar_select %p70, %s71, %s72
      %p76 = pneg %p70
      %p77 = scmp.eq.s32.totalorder %s17, 3
      %p78 = por %p76, %p77
      %p79 = scmp.ne.s32.totalorder %s71, %s74
      %p80 = scmp.eq.s32.totalorder %s17, 0
      %p81 = por %p79, %p80
      %p82 = scmp.ne.s32.totalorder %s71, %s74
      %p83 = scmp.eq.s32.totalorder %s22, 3
      %p84 = por %p82, %p83
      %p85 = scmp.ne.s32.totalorder %s74, %s75
      %p86 = scmp.eq.s32.totalorder %s22, 0
      %p87 = por %p85, %p86
      %p88 = scmp.ne.s32.totalorder %s74, %s75
      %p89 = scmp.eq.s32.totalorder %s23, 3
      %p90 = por %p88, %p89
      %p92 = scmp.ne.s32.totalorder %s75, %s91
      %p93 = scmp.eq.s32.totalorder %s23, 0
      %p94 = por %p92, %p93
      %s95 = ssub.s32 %s24, %s36
      %s96 = ssub.s32 %s25, %s32
      %s97 = sor.u32 %s95, %s96
      %p98 = scmp.eq.s32.totalorder %s97, 0
      %s100 = sadd.s32 %s99, 1
      %s101 = scalar_select %p98, %s99, %s100
      %p104 = pneg %p98
      %p105 = scmp.eq.s32.totalorder %s17, 3
      %p106 = por %p104, %p105
      %p107 = scmp.ne.s32.totalorder %s99, %s102
      %p108 = scmp.eq.s32.totalorder %s17, 0
      %p109 = por %p107, %p108
      %p110 = scmp.ne.s32.totalorder %s99, %s102
      %p111 = scmp.eq.s32.totalorder %s22, 3
      %p112 = por %p110, %p111
      %p113 = scmp.ne.s32.totalorder %s102, %s103
      %p114 = scmp.eq.s32.totalorder %s22, 0
      %p115 = por %p113, %p114
      %p116 = scmp.ne.s32.totalorder %s102, %s103
      %p117 = scmp.eq.s32.totalorder %s23, 3
      %p118 = por %p116, %p117
      %p120 = scmp.ne.s32.totalorder %s103, %s119
      %p121 = scmp.eq.s32.totalorder %s23, 0
      %p122 = por %p120, %p121
      %p123 = scmp.le.s32.totalorder 1, %s17
      %p124 = scmp.lt.s32.totalorder %s17, 5
      %p125 = pnand %p123, %p124
      %p126 = pneg %p125
      // Predicated region
      $region9: #{_unnamed_function_.1} parent=5 // pred_check
        _
      $region10: #{_unnamed_function_.1} parent=5 // pred_check_branch
        %128 = sbr.rel (%p125) target = $region12
      $region11: #{_unnamed_function_.1} parent=5 // pred_region
        %s129 = ssub.s32 %s17, 1
      $region12: #{_unnamed_function_.1} parent=5 // pred_fallthru
        _
      %p130 = scmp.lt.s32.totalorder %s17, 4
      // Predicated region
      $region13: #{_unnamed_function_.1} parent=5 // pred_check
        %p131 = pneg %p130
      $region14: #{_unnamed_function_.1} parent=5 // pred_check_branch
        %133 = sbr.rel (%p131) target = $region16
      $region15: #{_unnamed_function_.1} parent=5 // pred_region
        // Predicated region
        $region17: #{_unnamed_function_.1} parent=15 // pred_check
          %p134 = pneg %p51
        $region18: #{_unnamed_function_.1} parent=15 // pred_check_branch
          %136 = sbr.rel (%p134) target = $region20
        $region19: #{_unnamed_function_.1} parent=15 // pred_region
          %s137 = sand.u32 %s41, 1
          %s138 = scalar_lea.sflag [#allocation3], %s137
          %s139 = sand.u32 %s41, 1
          %s140 = smul.addr %s139, 16
          %s141 = scalar_lea.vmem [#allocation2], %s140
          %s143 = ssub.s32 256, 256
          %144 = vsyncadd %s138, %s143
          %s145 = smul.addr %s25, 2
          %s146 = smul.addr %s24, 8
          %s147 = sadd.s32 %s145, %s146
          %s148 = smul.addr %s147, 128
          %s149 = scalar_lea.hbm %s0, %s148
          %s150 = sshll.u32 %s141, 4
          %s151 = int_to_ptr.vmem [resolvable:$true] %s150
          %156 = dma.hbm_to_vmem [thread:$0]  %s149, 256, %s151, %s138, 128, 128, 8
        $region20: #{_unnamed_function_.1} parent=15 // pred_fallthru
          _
        // Predicated region
        $region21: #{_unnamed_function_.1} parent=15 // pred_check
          %p157 = pneg %p81
        $region22: #{_unnamed_function_.1} parent=15 // pred_check_branch
          %159 = sbr.rel (%p157) target = $region24
        $region23: #{_unnamed_function_.1} parent=15 // pred_region
          %s160 = sand.u32 %s71, 1
          %s161 = scalar_lea.sflag [#allocation6], %s160
          %s162 = sand.u32 %s71, 1
          %s163 = smul.addr %s162, 16
          %s164 = scalar_lea.vmem [#allocation5], %s163
          %s165 = sadd.s32 %s25, 2
          %s167 = ssub.s32 256, 256
          %168 = vsyncadd %s161, %s167
          %s169 = smul.addr %s165, 2
          %s170 = smul.addr %s24, 8
          %s171 = sadd.s32 %s169, %s170
          %s172 = smul.addr %s171, 128
          %s173 = scalar_lea.hbm %s1, %s172
          %s174 = sshll.u32 %s164, 4
          %s175 = int_to_ptr.vmem [resolvable:$true] %s174
          %180 = dma.hbm_to_vmem [thread:$0]  %s173, 256, %s175, %s161, 128, 128, 8
        $region24: #{_unnamed_function_.1} parent=15 // pred_fallthru
          _
      $region16: #{_unnamed_function_.1} parent=5 // pred_fallthru
        _
      %p181 = scmp.le.s32.totalorder 1, %s17
      %p182 = scmp.lt.s32.totalorder %s17, 5
      %p183 = pnand %p181, %p182
      %p184 = pneg %p183
      // Predicated region
      $region25: #{_unnamed_function_.1} parent=5 // pred_check
        _
      $region26: #{_unnamed_function_.1} parent=5 // pred_check_branch
        %186 = sbr.rel (%p183) target = $region28
      $region27: #{_unnamed_function_.1} parent=5 // pred_region
        %s187 = ssub.s32 %s17, 1
        %s188 = sand.u32 %s44, 1
        %s189 = scalar_lea.sflag [#allocation3], %s188
        %s190 = sand.u32 %s44, 1
        %s191 = smul.addr %s190, 16
        %s192 = scalar_lea.vmem [#allocation2], %s191
        // Predicated region
        $region29: #{_unnamed_function_.1} parent=27 // pred_check
          %p193 = pneg %p57
        $region30: #{_unnamed_function_.1} parent=27 // pred_check_branch
          %195 = sbr.rel (%p193) target = $region32
        $region31: #{_unnamed_function_.1} parent=27 // pred_region
          %196 = dma.done %s189, 256
        $region32: #{_unnamed_function_.1} parent=27 // pred_fallthru
          _
        %s197 = sand.u32 %s74, 1
        %s198 = scalar_lea.sflag [#allocation6], %s197
        %s199 = sand.u32 %s74, 1
        %s200 = smul.addr %s199, 16
        %s201 = scalar_lea.vmem [#allocation5], %s200
        // Predicated region
        $region33: #{_unnamed_function_.1} parent=27 // pred_check
          %p202 = pneg %p87
        $region34: #{_unnamed_function_.1} parent=27 // pred_check_branch
          %204 = sbr.rel (%p202) target = $region36
        $region35: #{_unnamed_function_.1} parent=27 // pred_region
          %205 = dma.done %s198, 256
        $region36: #{_unnamed_function_.1} parent=27 // pred_fallthru
          _
        %s206 = sand.u32 %s44, 1
        %s207 = scalar_lea.sflag [#allocation3], %s206
        %s208 = sand.u32 %s44, 1
        %s209 = smul.addr %s208, 16
        %s210 = scalar_lea.vmem [#allocation2], %s209
        %p211 = pneg %p57
        %p212 = pneg %p54
        %s213 = sand.u32 %s74, 1
        %s214 = scalar_lea.sflag [#allocation6], %s213
        %s215 = sand.u32 %s74, 1
        %s216 = smul.addr %s215, 16
        %s217 = scalar_lea.vmem [#allocation5], %s216
        %p218 = pneg %p87
        %p219 = pneg %p84
        %p220 = pneg %p115
        %p221 = pneg %p112
        %s222 = sand.u32 %s102, 1
        %s223 = scalar_lea.sflag [#allocation4], %s222
        %s224 = sand.u32 %s102, 1
        %s225 = smul.addr %s224, 16
        %s226 = scalar_lea.vmem [#allocation7], %s225
        %s227 = sadd.s32 %s27, 2
        %v228 = vld [vmem:[%s192] sm:$0xff]
        %v229 = vld [vmem:[%s192 + $0x8] sm:$0xff]
        %v230 = vtanh.pop %v228
        %v231 = vtanh.pop %v229
        %v232 = vld [vmem:[%s201] sm:$0xff]
        %v233 = vld [vmem:[%s201 + $0x8] sm:$0xff]
        %v234 = vxor.u32 %v232, 2147483648
        %v235 = vxor.u32 %v233, 2147483648
        %v236 = vmul.f32 %v234, 1.442695
        %v237 = vpow.pop %v236
        %v238 = vmul.f32 %v235, 1.442695
        %v239 = vpow.pop %v238
        %v240 = vadd.f32 %v237, 1.0
        %v241 = vadd.f32 %v239, 1.0
        %v242 = vrcp.pop %v240
        %v243 = vmul.f32 1.0, %v242
        %v244 = vrcp.pop %v241
        %v245 = vmul.f32 1.0, %v244
        %vm246 = vcmask 130048
        %v248 = vsel %vm246, %v230, 0
        %v251 = vsel %vm246, %v231, 0
        %253 = vmatprep.subr.mxu0 0.0
        %254 = vmatpush1.msra.mxu0 0.0
        %255 = vmatprep.subr.mxu0 0.0
        %256 = vmatpush1.msra.mxu0 0.0
        %257 = vmatprep.subr.mxu0 0.0
        %258 = vmatpush1.msra.mxu0 0.0
        %259 = vmatprep.subr.mxu0 0.0
        %260 = vmatpush1.msra.mxu0 0.0
        %261 = vmatprep.subr.mxu0 0.0
        %262 = vmatpush1.msra.mxu0 0.0
        %263 = vmatprep.subr.mxu0 0.0
        %264 = vmatpush1.msra.mxu0 0.0
        %265 = vmatprep.subr.mxu0 0.0
        %266 = vmatpush1.msra.mxu0 0.0
        %267 = vmatprep.subr.mxu0 0.0
        %268 = vmatpush1.msra.mxu0 0.0
        %269 = vmatprep.subr.mxu0 0.0
        %270 = vmatpush1.msra.mxu0 0.0
        %271 = vmatprep.subr.mxu0 0.0
        %272 = vmatpush1.msra.mxu0 0.0
        %273 = vmatprep.subr.mxu0 0.0
        %274 = vmatpush1.msra.mxu0 0.0
        %275 = vmatprep.subr.mxu0 0.0
        %276 = vmatpush1.msra.mxu0 0.0
        %277 = vmatprep.subr.mxu0 0.0
        %278 = vmatpush1.msra.mxu0 0.0
        %279 = vmatprep.subr.mxu0 0.0
        %280 = vmatpush1.msra.mxu0 0.0
        %281 = vmatprep.subr.mxu0 0.0
        %282 = vmatpush1.msra.mxu0 %v245
        %283 = vmatprep.subr.mxu0 0.0
        %284 = vmatpush1.msra.mxu0 %v243
        %285 = vmatprep.subr.mxu0 0.0
        %286 = vmatpush2.msra.mxu0 0.0
        %287 = vmatprep.subr.mxu0 0.0
        %288 = vmatpush2.msra.mxu0 0.0
        %289 = vmatprep.subr.mxu0 0.0
        %290 = vmatpush2.msra.mxu0 0.0
        %291 = vmatprep.subr.mxu0 0.0
        %292 = vmatpush2.msra.mxu0 0.0
        %293 = vmatprep.subr.mxu0 0.0
        %294 = vmatpush2.msra.mxu0 0.0
        %295 = vmatprep.subr.mxu0 0.0
        %296 = vmatpush2.msra.mxu0 0.0
        %297 = vmatprep.subr.mxu0 0.0
        %298 = vmatpush2.msra.mxu0 0.0
        %299 = vmatprep.subr.mxu0 0.0
        %300 = vmatpush2.msra.mxu0 0.0
        %301 = vmatprep.subr.mxu0 0.0
        %302 = vmatpush2.msra.mxu0 0.0
        %303 = vmatprep.subr.mxu0 0.0
        %304 = vmatpush2.msra.mxu0 0.0
        %305 = vmatprep.subr.mxu0 0.0
        %306 = vmatpush2.msra.mxu0 0.0
        %307 = vmatprep.subr.mxu0 0.0
        %308 = vmatpush2.msra.mxu0 0.0
        %309 = vmatprep.subr.mxu0 0.0
        %310 = vmatpush2.msra.mxu0 0.0
        %311 = vmatprep.subr.mxu0 0.0
        %312 = vmatpush2.msra.mxu0 0.0
        %313 = vmatprep.subr.mxu0 0.0
        %314 = vmatpush2.msra.mxu0 0.0
        %315 = vmatprep.subr.mxu0 0.0
        %316 = vmatpush2.msra.mxu0 0.0
        %317 = vmatprep.mubr.f32.mxu0 0.0
        %318 = vmatmul.mubr.f32.gmra.mxu0 %v248
        %v319 = vpop.f32.mrf.mxu0
        %v320 = vadd.f32 0.0, %v319
        %v321 = vpop.f32.mrf.mxu0
        %322 = vmatprep.mubr.f32.mxu0 0.0
        %323 = vmatmul.mubr.f32.gmra.mxu0 %v251
        %v324 = vpop.f32.mrf.mxu0
        %v325 = vadd.f32 0.0, %v324
        %v326 = vpop.f32.mrf.mxu0
        %327 = vdwg.mxu0
        %328 = vst.msk [vmem:[%s226] sm:$0xff] %vm246, %v320
        %329 = vst.msk [vmem:[%s226 + $0x8] sm:$0xff] %vm246, %v325
        %s330 = sand.u32 %s102, 1
        %s331 = scalar_lea.sflag [#allocation4], %s330
        %s332 = sand.u32 %s102, 1
        %s333 = smul.addr %s332, 16
        %s334 = scalar_lea.vmem [#allocation7], %s333
        // Predicated region
        $region37: #{_unnamed_function_.1} parent=27 // pred_check
          %p335 = pneg %p112
        $region38: #{_unnamed_function_.1} parent=27 // pred_check_branch
          %337 = sbr.rel (%p335) target = $region40
        $region39: #{_unnamed_function_.1} parent=27 // pred_region
          %s339 = ssub.s32 256, 256
          %340 = vsyncadd %s331, %s339
          %s341 = smul.addr %s27, 2
          %s342 = smul.addr %s26, 4
          %s343 = sadd.s32 %s341, %s342
          %s344 = smul.addr %s343, 128
          %s345 = scalar_lea.hbm %s2, %s344
          %s346 = sshll.u32 %s334, 4
          %s347 = int_to_ptr.vmem [resolvable:$true] %s346
          %352 = dma.vmem_to_hbm [thread:$0]  %s347, 256, %s345, %s331, 128, 128, 8
        $region40: #{_unnamed_function_.1} parent=27 // pred_fallthru
          _
      $region28: #{_unnamed_function_.1} parent=5 // pred_fallthru
        _
      %p353 = scmp.le.s32.totalorder 2, %s17
      // Predicated region
      $region41: #{_unnamed_function_.1} parent=5 // pred_check
        %p354 = pneg %p353
      $region42: #{_unnamed_function_.1} parent=5 // pred_check_branch
        %356 = sbr.rel (%p354) target = $region44
      $region43: #{_unnamed_function_.1} parent=5 // pred_region
        %s357 = ssub.s32 %s17, 2
        // Predicated region
        $region45: #{_unnamed_function_.1} parent=43 // pred_check
          %p358 = pneg %p118
        $region46: #{_unnamed_function_.1} parent=43 // pred_check_branch
          %360 = sbr.rel (%p358) target = $region48
        $region47: #{_unnamed_function_.1} parent=43 // pred_region
          %s361 = sand.u32 %s103, 1
          %s362 = scalar_lea.sflag [#allocation4], %s361
          %s363 = sand.u32 %s103, 1
          %s364 = smul.addr %s363, 16
          %s365 = scalar_lea.vmem [#allocation7], %s364
          %366 = dma.done %s362, 256
        $region48: #{_unnamed_function_.1} parent=43 // pred_fallthru
          _
      $region44: #{_unnamed_function_.1} parent=5 // pred_fallthru
        _
    $region6: #{_unnamed_function_.1} parent=1 // loop_footer
      %s21 = sadd.s32 1, %s17
    $region7: #{_unnamed_function_.1} parent=1 // loop_footer_branch
      %16 = sbr.rel target = $region3
    $region8: #{_unnamed_function_.1} parent=1 // loop_exit
      _
    %367 = vsyncpa [#allocation3], 1
    %s368 = scalar_lea.sflag [#allocation3], 1
    %369 = vsyncpa %s368, 1
    %370 = vsyncpa [#allocation6], 1
    %s371 = scalar_lea.sflag [#allocation6], 1
    %372 = vsyncpa %s371, 1
    %373 = vsyncpa [#allocation4], 1
    %s374 = scalar_lea.sflag [#allocation4], 1
    %375 = vsyncpa %s374, 1

</llo_original>
